<compile_context>
chip_gen: v7x
topology: tpu7x:2x2x1
jax: 0.10.0
libtpu: 0.0.40
codegen_flags: <defaults>
</compile_context>

<pallas_src>
import functools

import jax
import jax.numpy as jnp
from jax.experimental import pallas as pl
from jax.experimental.pallas import tpu as pltpu


def _round_up(x, m):
    return ((x + m - 1) // m) * m


def encoder_rnn_kernel(ids_ref, p_ref, whh_ref, h_out_ref, *, seq_len, batch_pad):
    """Single-invocation Encoder forward.

    ids_ref  : VMEM (T*Bp, 1) int32   token ids, t-major, batch padded to Bp
    p_ref    : VMEM (Vp, H)   f32     fused table  emb @ W_ih^T + (b_ih + b_hh)
    whh_ref  : VMEM (H, H)    f32     W_hh^T
    h_out_ref: VMEM (B, H)    f32     final hidden state (output)
    """
    tbp = seq_len * batch_pad
    vp, hidden = p_ref.shape
    batch = h_out_ref.shape[0]

    # 1) Fused embedding gather + input projection + bias: one MXU matmul.
    #    onehot rows have exactly one 1 (valid ids), so onehot @ P reproduces
    #    emb[id] @ W_ih^T + b_ih + b_hh exactly.
    ids = ids_ref[...]                                            # (T*Bp, 1)
    iota_v = jax.lax.broadcasted_iota(jnp.int32, (tbp, vp), 1)    # (T*Bp, Vp)
    onehot = (iota_v == ids).astype(jnp.float32)
    xp = jnp.dot(onehot, p_ref[...], preferred_element_type=jnp.float32)

    # 2) Serial recurrence, fully unrolled (T static & tiny). Values stay in
    #    vregs; each per-step slice is sublane-aligned because Bp % 8 == 0.
    whh = whh_ref[...]
    h = jnp.zeros((batch_pad, hidden), jnp.float32)
    for t in range(seq_len):
        xt = xp[t * batch_pad:(t + 1) * batch_pad, :]
        h = jnp.tanh(xt + jnp.dot(h, whh, preferred_element_type=jnp.float32))

    # 3) Single output write; drop batch-padding rows.
    h_out_ref[...] = h[:batch, :]


def init_encoder_params(emb_table, w_ih, w_hh, b_ih, b_hh):
    """One-time parameter preprocessing (hoisted out of the per-call path)."""
    v, _ = emb_table.shape
    h = w_ih.shape[0]
    vp = _round_up(v, 128)  # lane-pad the one-hot contraction dim
    p = (emb_table.astype(jnp.float32) @ jnp.transpose(w_ih).astype(jnp.float32)
         + (b_ih + b_hh).astype(jnp.float32))                      # (V, H)
    p_pad = jnp.zeros((vp, h), jnp.float32).at[:v, :].set(p)        # (Vp, H)
    whh_t = jnp.transpose(w_hh).astype(jnp.float32)                 # (H, H)
    return p_pad, whh_t


def encoder_forward(src, params):
    """src: (T, B) int32 token ids; returns hidden of shape (1, B, H)."""
    p_pad, whh_t = params
    seq_len, batch = src.shape
    vp, hidden = p_pad.shape
    batch_pad = _round_up(max(batch, 8), 8)

    # Pad batch to a sublane multiple (token 0 is valid; padded rows discarded).
    src_pad = jnp.pad(src.astype(jnp.int32), ((0, 0), (0, batch_pad - batch)))
    ids = src_pad.reshape(seq_len * batch_pad, 1)                   # t-major

    hidden_out = pl.pallas_call(
        functools.partial(encoder_rnn_kernel, seq_len=seq_len,
                          batch_pad=batch_pad),
        out_shape=jax.ShapeDtypeStruct((batch, hidden), jnp.float32),
        grid=(1,),                                   # whole recurrence, 1 step
        in_specs=[
            pl.BlockSpec((seq_len * batch_pad, 1), lambda i: (0, 0)),  # ids
            pl.BlockSpec((vp, hidden), lambda i: (0, 0)),              # fused P
            pl.BlockSpec((hidden, hidden), lambda i: (0, 0)),          # W_hh^T
        ],
        out_specs=pl.BlockSpec((batch, hidden), lambda i: (0, 0)),
        compiler_params=pltpu.CompilerParams(
            dimension_semantics=("arbitrary",),
        ),
    )(ids, p_pad, whh_t)

    return hidden_out[None]  # (1, B, H)


def encoder_forward_ref(src, emb_table, w_ih, w_hh, b_ih, b_hh):
    """Pure-JAX reference matching PyTorch nn.RNN (tanh) semantics."""
    embedded = jnp.take(emb_table, src, axis=0)  # (T, B, E)
    batch = src.shape[1]
    hidden = w_ih.shape[0]

    def step(h, x_t):
        h_new = jnp.tanh(x_t @ w_ih.T + b_ih + h @ w_hh.T + b_hh)
        return h_new, None

    h0 = jnp.zeros((batch, hidden), jnp.float32)
    h_last, _ = jax.lax.scan(step, h0, embedded)
    return h_last[None]


if __name__ == "__main__":
    # Small shapes consistent with the module's forward.
    INPUT_DIM = 50   # vocab size
    EMBED_DIM = 32
    HIDDEN_DIM = 32
    SEQ_LEN = 8
    BATCH = 4

    key = jax.random.PRNGKey(0)
    k_emb, k_wih, k_whh, k_bih, k_bhh, k_src = jax.random.split(key, 6)

    # Deterministic parameter init (shapes from nn.Embedding / nn.RNN).
    emb_table = jax.random.normal(k_emb, (INPUT_DIM, EMBED_DIM), jnp.float32)
    bound = 1.0 / jnp.sqrt(HIDDEN_DIM)
    w_ih = jax.random.uniform(k_wih, (HIDDEN_DIM, EMBED_DIM), jnp.float32,
                              -bound, bound)
    w_hh = jax.random.uniform(k_whh, (HIDDEN_DIM, HIDDEN_DIM), jnp.float32,
                              -bound, bound)
    b_ih = jax.random.uniform(k_bih, (HIDDEN_DIM,), jnp.float32, -bound, bound)
    b_hh = jax.random.uniform(k_bhh, (HIDDEN_DIM,), jnp.float32, -bound, bound)

    # Token ids, (seq_len, batch) as in PyTorch's default RNN layout.
    src = jax.random.randint(k_src, (SEQ_LEN, BATCH), 0, INPUT_DIM, jnp.int32)

    # One-time parameter fusion (outside the per-call hot path).
    params = init_encoder_params(emb_table, w_ih, w_hh, b_ih, b_hh)

    hidden = encoder_forward(src, params)
    hidden = jax.block_until_ready(hidden)

    hidden_ref = encoder_forward_ref(src, emb_table, w_ih, w_hh, b_ih, b_hh)
    assert hidden.shape == (1, BATCH, HIDDEN_DIM)
    assert jnp.allclose(hidden, hidden_ref, atol=1e-5, rtol=1e-5)

    print("KERNEL_OK")
</pallas_src>

<mosaic_0001>
module attributes {stable_mosaic.version = 11 : i64} {
  func.func @encoder_rnn_kernel(%arg0: i32, %arg1: memref<64x1xi32, #tpu.memory_space<vmem>>, %arg2: memref<128x32xf32, #tpu.memory_space<vmem>>, %arg3: memref<32x32xf32, #tpu.memory_space<vmem>>, %arg4: memref<4x32xf32, #tpu.memory_space<vmem>>) attributes {dimension_semantics = [#tpu.dimension_semantics<arbitrary>], iteration_bounds = array<i64: 1>, scalar_prefetch = 0 : i64, scratch_operands = 0 : i64, tpu.core_type = #tpu.core_type<tc>, window_params = [{pipeline_mode = #tpu.pipeline_mode<synchronous>, transform_indices = @transform_0, window_bounds = array<i64: 64, 1>}, {pipeline_mode = #tpu.pipeline_mode<synchronous>, transform_indices = @transform_1, window_bounds = array<i64: 128, 32>}, {pipeline_mode = #tpu.pipeline_mode<synchronous>, transform_indices = @transform_2, window_bounds = array<i64: 32, 32>}, {pipeline_mode = #tpu.pipeline_mode<synchronous>, transform_indices = @transform_3, window_bounds = array<i64: 4, 32>}]} {
    %c0 = arith.constant 0 : index
    %c0_0 = arith.constant 0 : index
    %0 = vector.load %arg1[%c0, %c0_0] : memref<64x1xi32, #tpu.memory_space<vmem>>, vector<64x1xi32>
    %1 = tpu.iota {dimensions = array<i32: 1>} : vector<64x128xi32>
    %2 = vector.broadcast %0 : vector<64x1xi32> to vector<64x128xi32>
    %3 = arith.cmpi eq, %1, %2 : vector<64x128xi32>
    %4 = arith.extui %3 : vector<64x128xi1> to vector<64x128xi32>
    %5 = arith.sitofp %4 : vector<64x128xi32> to vector<64x128xf32>
    %c0_1 = arith.constant 0 : index
    %c0_2 = arith.constant 0 : index
    %6 = vector.load %arg2[%c0_1, %c0_2] : memref<128x32xf32, #tpu.memory_space<vmem>>, vector<128x32xf32>
    %cst = arith.constant dense<0.000000e+00> : vector<64x32xf32>
    %7 = tpu.matmul %5, %6, %cst {dimension_numbers = #tpu.dot_dimension_numbers<[1], [0], [0], [1], [0, 0, 1, 1], [], []>} : vector<64x128xf32>, vector<128x32xf32>, vector<64x32xf32> -> vector<64x32xf32>
    %c0_3 = arith.constant 0 : index
    %c0_4 = arith.constant 0 : index
    %8 = vector.load %arg3[%c0_3, %c0_4] : memref<32x32xf32, #tpu.memory_space<vmem>>, vector<32x32xf32>
    %cst_5 = arith.constant 0.000000e+00 : f32
    %9 = vector.broadcast %cst_5 : f32 to vector<8x32xf32>
    %10 = vector.extract_strided_slice %7 {offsets = [0, 0], sizes = [8, 32], strides = [1, 1]} : vector<64x32xf32> to vector<8x32xf32>
    %cst_6 = arith.constant dense<0.000000e+00> : vector<8x32xf32>
    %11 = tpu.matmul %9, %8, %cst_6 {dimension_numbers = #tpu.dot_dimension_numbers<[1], [0], [0], [1], [0, 0, 1, 1], [], []>} : vector<8x32xf32>, vector<32x32xf32>, vector<8x32xf32> -> vector<8x32xf32>
    %12 = arith.addf %10, %11 : vector<8x32xf32>
    %13 = math.tanh %12 : vector<8x32xf32>
    %14 = vector.extract_strided_slice %7 {offsets = [8, 0], sizes = [8, 32], strides = [1, 1]} : vector<64x32xf32> to vector<8x32xf32>
    %cst_7 = arith.constant dense<0.000000e+00> : vector<8x32xf32>
    %15 = tpu.matmul %13, %8, %cst_7 {dimension_numbers = #tpu.dot_dimension_numbers<[1], [0], [0], [1], [0, 0, 1, 1], [], []>} : vector<8x32xf32>, vector<32x32xf32>, vector<8x32xf32> -> vector<8x32xf32>
    %16 = arith.addf %14, %15 : vector<8x32xf32>
    %17 = math.tanh %16 : vector<8x32xf32>
    %18 = vector.extract_strided_slice %7 {offsets = [16, 0], sizes = [8, 32], strides = [1, 1]} : vector<64x32xf32> to vector<8x32xf32>
    %cst_8 = arith.constant dense<0.000000e+00> : vector<8x32xf32>
    %19 = tpu.matmul %17, %8, %cst_8 {dimension_numbers = #tpu.dot_dimension_numbers<[1], [0], [0], [1], [0, 0, 1, 1], [], []>} : vector<8x32xf32>, vector<32x32xf32>, vector<8x32xf32> -> vector<8x32xf32>
    %20 = arith.addf %18, %19 : vector<8x32xf32>
    %21 = math.tanh %20 : vector<8x32xf32>
    %22 = vector.extract_strided_slice %7 {offsets = [24, 0], sizes = [8, 32], strides = [1, 1]} : vector<64x32xf32> to vector<8x32xf32>
    %cst_9 = arith.constant dense<0.000000e+00> : vector<8x32xf32>
    %23 = tpu.matmul %21, %8, %cst_9 {dimension_numbers = #tpu.dot_dimension_numbers<[1], [0], [0], [1], [0, 0, 1, 1], [], []>} : vector<8x32xf32>, vector<32x32xf32>, vector<8x32xf32> -> vector<8x32xf32>
    %24 = arith.addf %22, %23 : vector<8x32xf32>
    %25 = math.tanh %24 : vector<8x32xf32>
    %26 = vector.extract_strided_slice %7 {offsets = [32, 0], sizes = [8, 32], strides = [1, 1]} : vector<64x32xf32> to vector<8x32xf32>
    %cst_10 = arith.constant dense<0.000000e+00> : vector<8x32xf32>
    %27 = tpu.matmul %25, %8, %cst_10 {dimension_numbers = #tpu.dot_dimension_numbers<[1], [0], [0], [1], [0, 0, 1, 1], [], []>} : vector<8x32xf32>, vector<32x32xf32>, vector<8x32xf32> -> vector<8x32xf32>
    %28 = arith.addf %26, %27 : vector<8x32xf32>
    %29 = math.tanh %28 : vector<8x32xf32>
    %30 = vector.extract_strided_slice %7 {offsets = [40, 0], sizes = [8, 32], strides = [1, 1]} : vector<64x32xf32> to vector<8x32xf32>
    %cst_11 = arith.constant dense<0.000000e+00> : vector<8x32xf32>
    %31 = tpu.matmul %29, %8, %cst_11 {dimension_numbers = #tpu.dot_dimension_numbers<[1], [0], [0], [1], [0, 0, 1, 1], [], []>} : vector<8x32xf32>, vector<32x32xf32>, vector<8x32xf32> -> vector<8x32xf32>
    %32 = arith.addf %30, %31 : vector<8x32xf32>
    %33 = math.tanh %32 : vector<8x32xf32>
    %34 = vector.extract_strided_slice %7 {offsets = [48, 0], sizes = [8, 32], strides = [1, 1]} : vector<64x32xf32> to vector<8x32xf32>
    %cst_12 = arith.constant dense<0.000000e+00> : vector<8x32xf32>
    %35 = tpu.matmul %33, %8, %cst_12 {dimension_numbers = #tpu.dot_dimension_numbers<[1], [0], [0], [1], [0, 0, 1, 1], [], []>} : vector<8x32xf32>, vector<32x32xf32>, vector<8x32xf32> -> vector<8x32xf32>
    %36 = arith.addf %34, %35 : vector<8x32xf32>
    %37 = math.tanh %36 : vector<8x32xf32>
    %38 = vector.extract_strided_slice %7 {offsets = [56, 0], sizes = [8, 32], strides = [1, 1]} : vector<64x32xf32> to vector<8x32xf32>
    %cst_13 = arith.constant dense<0.000000e+00> : vector<8x32xf32>
    %39 = tpu.matmul %37, %8, %cst_13 {dimension_numbers = #tpu.dot_dimension_numbers<[1], [0], [0], [1], [0, 0, 1, 1], [], []>} : vector<8x32xf32>, vector<32x32xf32>, vector<8x32xf32> -> vector<8x32xf32>
    %40 = arith.addf %38, %39 : vector<8x32xf32>
    %41 = math.tanh %40 : vector<8x32xf32>
    %42 = vector.extract_strided_slice %41 {offsets = [0, 0], sizes = [4, 32], strides = [1, 1]} : vector<8x32xf32> to vector<4x32xf32>
    %c0_14 = arith.constant 0 : index
    %c0_15 = arith.constant 0 : index
    %43 = vector.load %arg4[%c0_14, %c0_15] : memref<4x32xf32, #tpu.memory_space<vmem>>, vector<4x32xf32>
    tpu.vector_store %arg4[%c0_14, %c0_15], %42 {strides = array<i32>} : memref<4x32xf32, #tpu.memory_space<vmem>>, vector<4x32xf32>,
    return
  }
  func.func @transform_0(%arg0: i32) -> (i32, i32) {
    %c0_i32 = arith.constant 0 : i32
    %c0_i32_0 = arith.constant 0 : i32
    %c0_i32_1 = arith.constant 0 : i32
    return %c0_i32, %c0_i32_0 : i32, i32
  }
  func.func @transform_1(%arg0: i32) -> (i32, i32) {
    %c0_i32 = arith.constant 0 : i32
    %c0_i32_0 = arith.constant 0 : i32
    %c0_i32_1 = arith.constant 0 : i32
    return %c0_i32, %c0_i32_0 : i32, i32
  }
  func.func @transform_2(%arg0: i32) -> (i32, i32) {
    %c0_i32 = arith.constant 0 : i32
    %c0_i32_0 = arith.constant 0 : i32
    %c0_i32_1 = arith.constant 0 : i32
    return %c0_i32, %c0_i32_0 : i32, i32
  }
  func.func @transform_3(%arg0: i32) -> (i32, i32) {
    %c0_i32 = arith.constant 0 : i32
    %c0_i32_0 = arith.constant 0 : i32
    %c0_i32_1 = arith.constant 0 : i32
    return %c0_i32, %c0_i32_0 : i32, i32
  }
}

</mosaic_0001>

<llo_original>
// kernel: tpu_custom_call.1
$region0: #{tpu_custom_call.1}
  #allocation0 [shape = 'u32[]', space=smem, size = 0x4, offset = 0x4, fixed_abs, tag = 'smem constant byte address 0x4 - core index']
  #allocation1 [shape = 'u32[144,128]{1,0:T(1,128)}', space=vmem, size = 0x12000, scoped, tag = 'internal scratch']
  %s0 = inlined_call_operand.vmem [shape: s32[64,1], index: 0, kind: input, shape index: {}]
  %s1 = inlined_call_operand.vmem [shape: f32[128,32], index: 1, kind: input, shape index: {}]
  %s2 = inlined_call_operand.vmem [shape: f32[32,32], index: 2, kind: input, shape index: {}]
  %s3 = inlined_call_operand.hbm [shape: f32[4,32], index: 3, kind: output, shape index: {}]
  %s4 = sld [smem:[#allocation0]]
  $region22: #{tpu_custom_call.1} parent=0
    _
  %s6 = ssub.s32 1, %s4
  %s7 = scalar_select 0, %s6, %s4
  $region1: #{tpu_custom_call.1} parent=0
    #allocation2 [shape = 'u8[2048]{0}', space=vmem, size = 0x800, scoped, tag = 'output window, operand 0, single buffered']
    #allocation3 [shape = 's32[1]{0}', space=sflag, size = 0x4, scoped, tag = 'scoped memory for tpu_custom_call.1']
    %8 = vsyncpa [#allocation3], 0
    // Predicated region
    $region2: #{tpu_custom_call.1} parent=1 // pred_check
      _
    $region3: #{tpu_custom_call.1} parent=1 // pred_check_branch
      %10 = sbr.rel (0) target = $region5
    $region4: #{tpu_custom_call.1} parent=1 // pred_region
      _
    $region5: #{tpu_custom_call.1} parent=1 // pred_fallthru
      _
    // Predicated region
    $region6: #{tpu_custom_call.1} parent=1 // pred_check
      _
    $region7: #{tpu_custom_call.1} parent=1 // pred_check_branch
      %12 = sbr.rel (0) target = $region9
    $region8: #{tpu_custom_call.1} parent=1 // pred_region
      _
    $region9: #{tpu_custom_call.1} parent=1 // pred_fallthru
      _
    // Predicated region
    $region10: #{tpu_custom_call.1} parent=1 // pred_check
      _
    $region11: #{tpu_custom_call.1} parent=1 // pred_check_branch
      %14 = sbr.rel (0) target = $region13
    $region12: #{tpu_custom_call.1} parent=1 // pred_region
      _
    $region13: #{tpu_custom_call.1} parent=1 // pred_fallthru
      _
    %v15 = vld [vmem:[%s0] sm:$0xff]
    %v16 = vld [vmem:[%s0 + $0x8] sm:$0xff]
    %v17 = vld [vmem:[%s0 + $0x10] sm:$0xff]
    %v18 = vld [vmem:[%s0 + $0x18] sm:$0xff]
    %v19 = vld [vmem:[%s0 + $0x20] sm:$0xff]
    %v20 = vld [vmem:[%s0 + $0x28] sm:$0xff]
    %v21 = vld [vmem:[%s0 + $0x30] sm:$0xff]
    %v22 = vld [vmem:[%s0 + $0x38] sm:$0xff]
    %v23 = vlaneseq
    %v24 = vand.u32 %v23, 127
    %25 = vset.pattern.permute.xlu0 0
    %26 = vperm.xlu0 %25, %v15
    %v27 = vpop.permute.xlu0 %26
    %28 = vset.pattern.permute.xlu0 0
    %29 = vperm.xlu0 %28, %v16
    %v30 = vpop.permute.xlu0 %29
    %31 = vset.pattern.permute.xlu0 0
    %32 = vperm.xlu0 %31, %v17
    %v33 = vpop.permute.xlu0 %32
    %34 = vset.pattern.permute.xlu0 0
    %35 = vperm.xlu0 %34, %v18
    %v36 = vpop.permute.xlu0 %35
    %37 = vset.pattern.permute.xlu0 0
    %38 = vperm.xlu0 %37, %v19
    %v39 = vpop.permute.xlu0 %38
    %40 = vset.pattern.permute.xlu0 0
    %41 = vperm.xlu0 %40, %v20
    %v42 = vpop.permute.xlu0 %41
    %43 = vset.pattern.permute.xlu0 0
    %44 = vperm.xlu0 %43, %v21
    %v45 = vpop.permute.xlu0 %44
    %46 = vset.pattern.permute.xlu0 0
    %47 = vperm.xlu0 %46, %v22
    %v48 = vpop.permute.xlu0 %47
    %vm49 = vcmp.eq.s32.totalorder %v24, %v27
    %vm50 = vcmp.eq.s32.totalorder %v24, %v30
    %vm51 = vcmp.eq.s32.totalorder %v24, %v33
    %vm52 = vcmp.eq.s32.totalorder %v24, %v36
    %vm53 = vcmp.eq.s32.totalorder %v24, %v39
    %vm54 = vcmp.eq.s32.totalorder %v24, %v42
    %vm55 = vcmp.eq.s32.totalorder %v24, %v45
    %vm56 = vcmp.eq.s32.totalorder %v24, %v48
    %v57 = vsel %vm49, 1, 0
    %v58 = vsel %vm50, 1, 0
    %v59 = vsel %vm51, 1, 0
    %v60 = vsel %vm52, 1, 0
    %v61 = vsel %vm53, 1, 0
    %v62 = vsel %vm54, 1, 0
    %v63 = vsel %vm55, 1, 0
    %v64 = vsel %vm56, 1, 0
    %v65 = vcvt.s32.f32 %v57
    %v66 = vcvt.s32.f32 %v58
    %v67 = vcvt.s32.f32 %v59
    %v68 = vcvt.s32.f32 %v60
    %v69 = vcvt.s32.f32 %v61
    %v70 = vcvt.s32.f32 %v62
    %v71 = vcvt.s32.f32 %v63
    %v72 = vcvt.s32.f32 %v64
    %v73 = vld [vmem:[%s1] sm:$0xff]
    %v74 = vld [vmem:[%s1 + $0x8] sm:$0xff]
    %v75 = vld [vmem:[%s1 + $0x10] sm:$0xff]
    %v76 = vld [vmem:[%s1 + $0x18] sm:$0xff]
    %v77 = vld [vmem:[%s1 + $0x20] sm:$0xff]
    %v78 = vld [vmem:[%s1 + $0x28] sm:$0xff]
    %v79 = vld [vmem:[%s1 + $0x30] sm:$0xff]
    %v80 = vld [vmem:[%s1 + $0x38] sm:$0xff]
    %v81 = vld [vmem:[%s1 + $0x40] sm:$0xff]
    %v82 = vld [vmem:[%s1 + $0x48] sm:$0xff]
    %v83 = vld [vmem:[%s1 + $0x50] sm:$0xff]
    %v84 = vld [vmem:[%s1 + $0x58] sm:$0xff]
    %v85 = vld [vmem:[%s1 + $0x60] sm:$0xff]
    %v86 = vld [vmem:[%s1 + $0x68] sm:$0xff]
    %v87 = vld [vmem:[%s1 + $0x70] sm:$0xff]
    %v88 = vld [vmem:[%s1 + $0x78] sm:$0xff]
    %89 = vmatprep.subr.mxu0 0.0
    %90 = vmatpush1.msra.mxu0 %v73
    %91 = vmatprep.subr.mxu0 0.0
    %92 = vmatpush1.msra.mxu0 %v74
    %93 = vmatprep.subr.mxu0 0.0
    %94 = vmatpush1.msra.mxu0 %v75
    %95 = vmatprep.subr.mxu0 0.0
    %96 = vmatpush1.msra.mxu0 %v76
    %97 = vmatprep.subr.mxu0 0.0
    %98 = vmatpush1.msra.mxu0 %v77
    %99 = vmatprep.subr.mxu0 0.0
    %100 = vmatpush1.msra.mxu0 %v78
    %101 = vmatprep.subr.mxu0 0.0
    %102 = vmatpush1.msra.mxu0 %v79
    %103 = vmatprep.subr.mxu0 0.0
    %104 = vmatpush1.msra.mxu0 %v80
    %105 = vmatprep.subr.mxu0 0.0
    %106 = vmatpush1.msra.mxu0 %v81
    %107 = vmatprep.subr.mxu0 0.0
    %108 = vmatpush1.msra.mxu0 %v82
    %109 = vmatprep.subr.mxu0 0.0
    %110 = vmatpush1.msra.mxu0 %v83
    %111 = vmatprep.subr.mxu0 0.0
    %112 = vmatpush1.msra.mxu0 %v84
    %113 = vmatprep.subr.mxu0 0.0
    %114 = vmatpush1.msra.mxu0 %v85
    %115 = vmatprep.subr.mxu0 0.0
    %116 = vmatpush1.msra.mxu0 %v86
    %117 = vmatprep.subr.mxu0 0.0
    %118 = vmatpush1.msra.mxu0 %v87
    %119 = vmatprep.subr.mxu0 0.0
    %120 = vmatpush1.msra.mxu0 %v88
    %121 = vmatprep.subr.mxu0 0.0
    %122 = vmatpush1.msra.mxu0 0.0
    %123 = vmatprep.subr.mxu0 0.0
    %124 = vmatpush1.msra.mxu0 0.0
    %125 = vmatprep.subr.mxu0 0.0
    %126 = vmatpush1.msra.mxu0 0.0
    %127 = vmatprep.subr.mxu0 0.0
    %128 = vmatpush1.msra.mxu0 0.0
    %129 = vmatprep.subr.mxu0 0.0
    %130 = vmatpush1.msra.mxu0 0.0
    %131 = vmatprep.subr.mxu0 0.0
    %132 = vmatpush1.msra.mxu0 0.0
    %133 = vmatprep.subr.mxu0 0.0
    %134 = vmatpush1.msra.mxu0 0.0
    %135 = vmatprep.subr.mxu0 0.0
    %136 = vmatpush1.msra.mxu0 0.0
    %137 = vmatprep.subr.mxu0 0.0
    %138 = vmatpush1.msra.mxu0 0.0
    %139 = vmatprep.subr.mxu0 0.0
    %140 = vmatpush1.msra.mxu0 0.0
    %141 = vmatprep.subr.mxu0 0.0
    %142 = vmatpush1.msra.mxu0 0.0
    %143 = vmatprep.subr.mxu0 0.0
    %144 = vmatpush1.msra.mxu0 0.0
    %145 = vmatprep.subr.mxu0 0.0
    %146 = vmatpush1.msra.mxu0 0.0
    %147 = vmatprep.subr.mxu0 0.0
    %148 = vmatpush1.msra.mxu0 0.0
    %149 = vmatprep.subr.mxu0 0.0
    %150 = vmatpush1.msra.mxu0 0.0
    %151 = vmatprep.subr.mxu0 0.0
    %152 = vmatpush1.msra.mxu0 0.0
    %153 = vmatprep.mubr.f32.mxu0 0.0
    %154 = vmatmul.mubr.f32.gmra.mrb[0].mxu0 %v65
    %v155 = vpop.f32.mrb[0].mxu0
    %v156 = vadd.f32 0.0, %v155
    %v157 = vpop.f32.mrb[0].mxu0
    %158 = vmatprep.mubr.f32.mxu0 0.0
    %159 = vmatmul.mubr.f32.gmra.mrb[0].mxu0 %v66
    %v160 = vpop.f32.mrb[0].mxu0
    %v161 = vadd.f32 0.0, %v160
    %v162 = vpop.f32.mrb[0].mxu0
    %163 = vmatprep.mubr.f32.mxu0 0.0
    %164 = vmatmul.mubr.f32.gmra.mrb[0].mxu0 %v67
    %v165 = vpop.f32.mrb[0].mxu0
    %v166 = vadd.f32 0.0, %v165
    %v167 = vpop.f32.mrb[0].mxu0
    %168 = vmatprep.mubr.f32.mxu0 0.0
    %169 = vmatmul.mubr.f32.gmra.mrb[0].mxu0 %v68
    %v170 = vpop.f32.mrb[0].mxu0
    %v171 = vadd.f32 0.0, %v170
    %v172 = vpop.f32.mrb[0].mxu0
    %173 = vmatprep.mubr.f32.mxu0 0.0
    %174 = vmatmul.mubr.f32.gmra.mrb[0].mxu0 %v69
    %v175 = vpop.f32.mrb[0].mxu0
    %v176 = vadd.f32 0.0, %v175
    %v177 = vpop.f32.mrb[0].mxu0
    %178 = vmatprep.mubr.f32.mxu0 0.0
    %179 = vmatmul.mubr.f32.gmra.mrb[0].mxu0 %v70
    %v180 = vpop.f32.mrb[0].mxu0
    %v181 = vadd.f32 0.0, %v180
    %v182 = vpop.f32.mrb[0].mxu0
    %183 = vmatprep.mubr.f32.mxu0 0.0
    %184 = vmatmul.mubr.f32.gmra.mrb[0].mxu0 %v71
    %v185 = vpop.f32.mrb[0].mxu0
    %v186 = vadd.f32 0.0, %v185
    %v187 = vpop.f32.mrb[0].mxu0
    %188 = vmatprep.mubr.f32.mxu0 0.0
    %189 = vmatmul.mubr.f32.gmra.mrb[0].mxu0 %v72
    %v190 = vpop.f32.mrb[0].mxu0
    %v191 = vadd.f32 0.0, %v190
    %v192 = vpop.f32.mrb[0].mxu0
    %193 = vdwg.mxu0
    %v194 = vld [vmem:[%s2] sm:$0xff]
    %v195 = vld [vmem:[%s2 + $0x8] sm:$0xff]
    %v196 = vld [vmem:[%s2 + $0x10] sm:$0xff]
    %v197 = vld [vmem:[%s2 + $0x18] sm:$0xff]
    %vm198 = vcmask 261120
    %v200 = vsel %vm198, 0.0, 0
    %202 = vmatprep.subr.mxu0 0.0
    %203 = vmatpush1.msra.mxu0 %v194
    %204 = vmatprep.subr.mxu0 0.0
    %205 = vmatpush1.msra.mxu0 %v195
    %206 = vmatprep.subr.mxu0 0.0
    %207 = vmatpush1.msra.mxu0 %v196
    %208 = vmatprep.subr.mxu0 0.0
    %209 = vmatpush1.msra.mxu0 %v197
    %210 = vmatprep.subr.mxu0 0.0
    %211 = vmatpush1.msra.mxu0 0.0
    %212 = vmatprep.subr.mxu0 0.0
    %213 = vmatpush1.msra.mxu0 0.0
    %214 = vmatprep.subr.mxu0 0.0
    %215 = vmatpush1.msra.mxu0 0.0
    %216 = vmatprep.subr.mxu0 0.0
    %217 = vmatpush1.msra.mxu0 0.0
    %218 = vmatprep.subr.mxu0 0.0
    %219 = vmatpush1.msra.mxu0 0.0
    %220 = vmatprep.subr.mxu0 0.0
    %221 = vmatpush1.msra.mxu0 0.0
    %222 = vmatprep.subr.mxu0 0.0
    %223 = vmatpush1.msra.mxu0 0.0
    %224 = vmatprep.subr.mxu0 0.0
    %225 = vmatpush1.msra.mxu0 0.0
    %226 = vmatprep.subr.mxu0 0.0
    %227 = vmatpush1.msra.mxu0 0.0
    %228 = vmatprep.subr.mxu0 0.0
    %229 = vmatpush1.msra.mxu0 0.0
    %230 = vmatprep.subr.mxu0 0.0
    %231 = vmatpush1.msra.mxu0 0.0
    %232 = vmatprep.subr.mxu0 0.0
    %233 = vmatpush1.msra.mxu0 0.0
    %234 = vmatprep.subr.mxu0 0.0
    %235 = vmatpush1.msra.mxu0 0.0
    %236 = vmatprep.subr.mxu0 0.0
    %237 = vmatpush1.msra.mxu0 0.0
    %238 = vmatprep.subr.mxu0 0.0
    %239 = vmatpush1.msra.mxu0 0.0
    %240 = vmatprep.subr.mxu0 0.0
    %241 = vmatpush1.msra.mxu0 0.0
    %242 = vmatprep.subr.mxu0 0.0
    %243 = vmatpush1.msra.mxu0 0.0
    %244 = vmatprep.subr.mxu0 0.0
    %245 = vmatpush1.msra.mxu0 0.0
    %246 = vmatprep.subr.mxu0 0.0
    %247 = vmatpush1.msra.mxu0 0.0
    %248 = vmatprep.subr.mxu0 0.0
    %249 = vmatpush1.msra.mxu0 0.0
    %250 = vmatprep.subr.mxu0 0.0
    %251 = vmatpush1.msra.mxu0 0.0
    %252 = vmatprep.subr.mxu0 0.0
    %253 = vmatpush1.msra.mxu0 0.0
    %254 = vmatprep.subr.mxu0 0.0
    %255 = vmatpush1.msra.mxu0 0.0
    %256 = vmatprep.subr.mxu0 0.0
    %257 = vmatpush1.msra.mxu0 0.0
    %258 = vmatprep.subr.mxu0 0.0
    %259 = vmatpush1.msra.mxu0 0.0
    %260 = vmatprep.subr.mxu0 0.0
    %261 = vmatpush1.msra.mxu0 0.0
    %262 = vmatprep.subr.mxu0 0.0
    %263 = vmatpush1.msra.mxu0 0.0
    %264 = vmatprep.subr.mxu0 0.0
    %265 = vmatpush1.msra.mxu0 0.0
    %266 = vmatprep.mubr.f32.mxu0 0.0
    %267 = vmatmul.mubr.f32.gmra.mrb[0].mxu0 %v200
    %v268 = vpop.f32.mrb[0].mxu0
    %v269 = vadd.f32 0.0, %v268
    %v270 = vpop.f32.mrb[0].mxu0
    %271 = vdwg.mxu0
    %v272 = vadd.f32 %v156, %v269
    %v273 = vtanh.pop %v272
    %v275 = vsel %vm198, %v273, 0
    %277 = vmatprep.subr.mxu0 0.0
    %278 = vmatpush1.msra.mxu0 %v194
    %279 = vmatprep.subr.mxu0 0.0
    %280 = vmatpush1.msra.mxu0 %v195
    %281 = vmatprep.subr.mxu0 0.0
    %282 = vmatpush1.msra.mxu0 %v196
    %283 = vmatprep.subr.mxu0 0.0
    %284 = vmatpush1.msra.mxu0 %v197
    %285 = vmatprep.subr.mxu0 0.0
    %286 = vmatpush1.msra.mxu0 0.0
    %287 = vmatprep.subr.mxu0 0.0
    %288 = vmatpush1.msra.mxu0 0.0
    %289 = vmatprep.subr.mxu0 0.0
    %290 = vmatpush1.msra.mxu0 0.0
    %291 = vmatprep.subr.mxu0 0.0
    %292 = vmatpush1.msra.mxu0 0.0
    %293 = vmatprep.subr.mxu0 0.0
    %294 = vmatpush1.msra.mxu0 0.0
    %295 = vmatprep.subr.mxu0 0.0
    %296 = vmatpush1.msra.mxu0 0.0
    %297 = vmatprep.subr.mxu0 0.0
    %298 = vmatpush1.msra.mxu0 0.0
    %299 = vmatprep.subr.mxu0 0.0
    %300 = vmatpush1.msra.mxu0 0.0
    %301 = vmatprep.subr.mxu0 0.0
    %302 = vmatpush1.msra.mxu0 0.0
    %303 = vmatprep.subr.mxu0 0.0
    %304 = vmatpush1.msra.mxu0 0.0
    %305 = vmatprep.subr.mxu0 0.0
    %306 = vmatpush1.msra.mxu0 0.0
    %307 = vmatprep.subr.mxu0 0.0
    %308 = vmatpush1.msra.mxu0 0.0
    %309 = vmatprep.subr.mxu0 0.0
    %310 = vmatpush1.msra.mxu0 0.0
    %311 = vmatprep.subr.mxu0 0.0
    %312 = vmatpush1.msra.mxu0 0.0
    %313 = vmatprep.subr.mxu0 0.0
    %314 = vmatpush1.msra.mxu0 0.0
    %315 = vmatprep.subr.mxu0 0.0
    %316 = vmatpush1.msra.mxu0 0.0
    %317 = vmatprep.subr.mxu0 0.0
    %318 = vmatpush1.msra.mxu0 0.0
    %319 = vmatprep.subr.mxu0 0.0
    %320 = vmatpush1.msra.mxu0 0.0
    %321 = vmatprep.subr.mxu0 0.0
    %322 = vmatpush1.msra.mxu0 0.0
    %323 = vmatprep.subr.mxu0 0.0
    %324 = vmatpush1.msra.mxu0 0.0
    %325 = vmatprep.subr.mxu0 0.0
    %326 = vmatpush1.msra.mxu0 0.0
    %327 = vmatprep.subr.mxu0 0.0
    %328 = vmatpush1.msra.mxu0 0.0
    %329 = vmatprep.subr.mxu0 0.0
    %330 = vmatpush1.msra.mxu0 0.0
    %331 = vmatprep.subr.mxu0 0.0
    %332 = vmatpush1.msra.mxu0 0.0
    %333 = vmatprep.subr.mxu0 0.0
    %334 = vmatpush1.msra.mxu0 0.0
    %335 = vmatprep.subr.mxu0 0.0
    %336 = vmatpush1.msra.mxu0 0.0
    %337 = vmatprep.subr.mxu0 0.0
    %338 = vmatpush1.msra.mxu0 0.0
    %339 = vmatprep.subr.mxu0 0.0
    %340 = vmatpush1.msra.mxu0 0.0
    %341 = vmatprep.mubr.f32.mxu0 0.0
    %342 = vmatmul.mubr.f32.gmra.mrb[0].mxu0 %v275
    %v343 = vpop.f32.mrb[0].mxu0
    %v344 = vadd.f32 0.0, %v343
    %v345 = vpop.f32.mrb[0].mxu0
    %346 = vdwg.mxu0
    %v347 = vadd.f32 %v161, %v344
    %v348 = vtanh.pop %v347
    %v350 = vsel %vm198, %v348, 0
    %352 = vmatprep.subr.mxu0 0.0
    %353 = vmatpush1.msra.mxu0 %v194
    %354 = vmatprep.subr.mxu0 0.0
    %355 = vmatpush1.msra.mxu0 %v195
    %356 = vmatprep.subr.mxu0 0.0
    %357 = vmatpush1.msra.mxu0 %v196
    %358 = vmatprep.subr.mxu0 0.0
    %359 = vmatpush1.msra.mxu0 %v197
    %360 = vmatprep.subr.mxu0 0.0
    %361 = vmatpush1.msra.mxu0 0.0
    %362 = vmatprep.subr.mxu0 0.0
    %363 = vmatpush1.msra.mxu0 0.0
    %364 = vmatprep.subr.mxu0 0.0
    %365 = vmatpush1.msra.mxu0 0.0
    %366 = vmatprep.subr.mxu0 0.0
    %367 = vmatpush1.msra.mxu0 0.0
    %368 = vmatprep.subr.mxu0 0.0
    %369 = vmatpush1.msra.mxu0 0.0
    %370 = vmatprep.subr.mxu0 0.0
    %371 = vmatpush1.msra.mxu0 0.0
    %372 = vmatprep.subr.mxu0 0.0
    %373 = vmatpush1.msra.mxu0 0.0
    %374 = vmatprep.subr.mxu0 0.0
    %375 = vmatpush1.msra.mxu0 0.0
    %376 = vmatprep.subr.mxu0 0.0
    %377 = vmatpush1.msra.mxu0 0.0
    %378 = vmatprep.subr.mxu0 0.0
    %379 = vmatpush1.msra.mxu0 0.0
    %380 = vmatprep.subr.mxu0 0.0
    %381 = vmatpush1.msra.mxu0 0.0
    %382 = vmatprep.subr.mxu0 0.0
    %383 = vmatpush1.msra.mxu0 0.0
    %384 = vmatprep.subr.mxu0 0.0
    %385 = vmatpush1.msra.mxu0 0.0
    %386 = vmatprep.subr.mxu0 0.0
    %387 = vmatpush1.msra.mxu0 0.0
    %388 = vmatprep.subr.mxu0 0.0
    %389 = vmatpush1.msra.mxu0 0.0
    %390 = vmatprep.subr.mxu0 0.0
    %391 = vmatpush1.msra.mxu0 0.0
    %392 = vmatprep.subr.mxu0 0.0
    %393 = vmatpush1.msra.mxu0 0.0
    %394 = vmatprep.subr.mxu0 0.0
    %395 = vmatpush1.msra.mxu0 0.0
    %396 = vmatprep.subr.mxu0 0.0
    %397 = vmatpush1.msra.mxu0 0.0
    %398 = vmatprep.subr.mxu0 0.0
    %399 = vmatpush1.msra.mxu0 0.0
    %400 = vmatprep.subr.mxu0 0.0
    %401 = vmatpush1.msra.mxu0 0.0
    %402 = vmatprep.subr.mxu0 0.0
    %403 = vmatpush1.msra.mxu0 0.0
    %404 = vmatprep.subr.mxu0 0.0
    %405 = vmatpush1.msra.mxu0 0.0
    %406 = vmatprep.subr.mxu0 0.0
    %407 = vmatpush1.msra.mxu0 0.0
    %408 = vmatprep.subr.mxu0 0.0
    %409 = vmatpush1.msra.mxu0 0.0
    %410 = vmatprep.subr.mxu0 0.0
    %411 = vmatpush1.msra.mxu0 0.0
    %412 = vmatprep.subr.mxu0 0.0
    %413 = vmatpush1.msra.mxu0 0.0
    %414 = vmatprep.subr.mxu0 0.0
    %415 = vmatpush1.msra.mxu0 0.0
    %416 = vmatprep.mubr.f32.mxu0 0.0
    %417 = vmatmul.mubr.f32.gmra.mrb[0].mxu0 %v350
    %v418 = vpop.f32.mrb[0].mxu0
    %v419 = vadd.f32 0.0, %v418
    %v420 = vpop.f32.mrb[0].mxu0
    %421 = vdwg.mxu0
    %v422 = vadd.f32 %v166, %v419
    %v423 = vtanh.pop %v422
    %v425 = vsel %vm198, %v423, 0
    %427 = vmatprep.subr.mxu0 0.0
    %428 = vmatpush1.msra.mxu0 %v194
    %429 = vmatprep.subr.mxu0 0.0
    %430 = vmatpush1.msra.mxu0 %v195
    %431 = vmatprep.subr.mxu0 0.0
    %432 = vmatpush1.msra.mxu0 %v196
    %433 = vmatprep.subr.mxu0 0.0
    %434 = vmatpush1.msra.mxu0 %v197
    %435 = vmatprep.subr.mxu0 0.0
    %436 = vmatpush1.msra.mxu0 0.0
    %437 = vmatprep.subr.mxu0 0.0
    %438 = vmatpush1.msra.mxu0 0.0
    %439 = vmatprep.subr.mxu0 0.0
    %440 = vmatpush1.msra.mxu0 0.0
    %441 = vmatprep.subr.mxu0 0.0
    %442 = vmatpush1.msra.mxu0 0.0
    %443 = vmatprep.subr.mxu0 0.0
    %444 = vmatpush1.msra.mxu0 0.0
    %445 = vmatprep.subr.mxu0 0.0
    %446 = vmatpush1.msra.mxu0 0.0
    %447 = vmatprep.subr.mxu0 0.0
    %448 = vmatpush1.msra.mxu0 0.0
    %449 = vmatprep.subr.mxu0 0.0
    %450 = vmatpush1.msra.mxu0 0.0
    %451 = vmatprep.subr.mxu0 0.0
    %452 = vmatpush1.msra.mxu0 0.0
    %453 = vmatprep.subr.mxu0 0.0
    %454 = vmatpush1.msra.mxu0 0.0
    %455 = vmatprep.subr.mxu0 0.0
    %456 = vmatpush1.msra.mxu0 0.0
    %457 = vmatprep.subr.mxu0 0.0
    %458 = vmatpush1.msra.mxu0 0.0
    %459 = vmatprep.subr.mxu0 0.0
    %460 = vmatpush1.msra.mxu0 0.0
    %461 = vmatprep.subr.mxu0 0.0
    %462 = vmatpush1.msra.mxu0 0.0
    %463 = vmatprep.subr.mxu0 0.0
    %464 = vmatpush1.msra.mxu0 0.0
    %465 = vmatprep.subr.mxu0 0.0
    %466 = vmatpush1.msra.mxu0 0.0
    %467 = vmatprep.subr.mxu0 0.0
    %468 = vmatpush1.msra.mxu0 0.0
    %469 = vmatprep.subr.mxu0 0.0
    %470 = vmatpush1.msra.mxu0 0.0
    %471 = vmatprep.subr.mxu0 0.0
    %472 = vmatpush1.msra.mxu0 0.0
    %473 = vmatprep.subr.mxu0 0.0
    %474 = vmatpush1.msra.mxu0 0.0
    %475 = vmatprep.subr.mxu0 0.0
    %476 = vmatpush1.msra.mxu0 0.0
    %477 = vmatprep.subr.mxu0 0.0
    %478 = vmatpush1.msra.mxu0 0.0
    %479 = vmatprep.subr.mxu0 0.0
    %480 = vmatpush1.msra.mxu0 0.0
    %481 = vmatprep.subr.mxu0 0.0
    %482 = vmatpush1.msra.mxu0 0.0
    %483 = vmatprep.subr.mxu0 0.0
    %484 = vmatpush1.msra.mxu0 0.0
    %485 = vmatprep.subr.mxu0 0.0
    %486 = vmatpush1.msra.mxu0 0.0
    %487 = vmatprep.subr.mxu0 0.0
    %488 = vmatpush1.msra.mxu0 0.0
    %489 = vmatprep.subr.mxu0 0.0
    %490 = vmatpush1.msra.mxu0 0.0
    %491 = vmatprep.mubr.f32.mxu0 0.0
    %492 = vmatmul.mubr.f32.gmra.mrb[0].mxu0 %v425
    %v493 = vpop.f32.mrb[0].mxu0
    %v494 = vadd.f32 0.0, %v493
    %v495 = vpop.f32.mrb[0].mxu0
    %496 = vdwg.mxu0
    %v497 = vadd.f32 %v171, %v494
    %v498 = vtanh.pop %v497
    %v500 = vsel %vm198, %v498, 0
    %502 = vmatprep.subr.mxu0 0.0
    %503 = vmatpush1.msra.mxu0 %v194
    %504 = vmatprep.subr.mxu0 0.0
    %505 = vmatpush1.msra.mxu0 %v195
    %506 = vmatprep.subr.mxu0 0.0
    %507 = vmatpush1.msra.mxu0 %v196
    %508 = vmatprep.subr.mxu0 0.0
    %509 = vmatpush1.msra.mxu0 %v197
    %510 = vmatprep.subr.mxu0 0.0
    %511 = vmatpush1.msra.mxu0 0.0
    %512 = vmatprep.subr.mxu0 0.0
    %513 = vmatpush1.msra.mxu0 0.0
    %514 = vmatprep.subr.mxu0 0.0
    %515 = vmatpush1.msra.mxu0 0.0
    %516 = vmatprep.subr.mxu0 0.0
    %517 = vmatpush1.msra.mxu0 0.0
    %518 = vmatprep.subr.mxu0 0.0
    %519 = vmatpush1.msra.mxu0 0.0
    %520 = vmatprep.subr.mxu0 0.0
    %521 = vmatpush1.msra.mxu0 0.0
    %522 = vmatprep.subr.mxu0 0.0
    %523 = vmatpush1.msra.mxu0 0.0
    %524 = vmatprep.subr.mxu0 0.0
    %525 = vmatpush1.msra.mxu0 0.0
    %526 = vmatprep.subr.mxu0 0.0
    %527 = vmatpush1.msra.mxu0 0.0
    %528 = vmatprep.subr.mxu0 0.0
    %529 = vmatpush1.msra.mxu0 0.0
    %530 = vmatprep.subr.mxu0 0.0
    %531 = vmatpush1.msra.mxu0 0.0
    %532 = vmatprep.subr.mxu0 0.0
    %533 = vmatpush1.msra.mxu0 0.0
    %534 = vmatprep.subr.mxu0 0.0
    %535 = vmatpush1.msra.mxu0 0.0
    %536 = vmatprep.subr.mxu0 0.0
    %537 = vmatpush1.msra.mxu0 0.0
    %538 = vmatprep.subr.mxu0 0.0
    %539 = vmatpush1.msra.mxu0 0.0
    %540 = vmatprep.subr.mxu0 0.0
    %541 = vmatpush1.msra.mxu0 0.0
    %542 = vmatprep.subr.mxu0 0.0
    %543 = vmatpush1.msra.mxu0 0.0
    %544 = vmatprep.subr.mxu0 0.0
    %545 = vmatpush1.msra.mxu0 0.0
    %546 = vmatprep.subr.mxu0 0.0
    %547 = vmatpush1.msra.mxu0 0.0
    %548 = vmatprep.subr.mxu0 0.0
    %549 = vmatpush1.msra.mxu0 0.0
    %550 = vmatprep.subr.mxu0 0.0
    %551 = vmatpush1.msra.mxu0 0.0
    %552 = vmatprep.subr.mxu0 0.0
    %553 = vmatpush1.msra.mxu0 0.0
    %554 = vmatprep.subr.mxu0 0.0
    %555 = vmatpush1.msra.mxu0 0.0
    %556 = vmatprep.subr.mxu0 0.0
    %557 = vmatpush1.msra.mxu0 0.0
    %558 = vmatprep.subr.mxu0 0.0
    %559 = vmatpush1.msra.mxu0 0.0
    %560 = vmatprep.subr.mxu0 0.0
    %561 = vmatpush1.msra.mxu0 0.0
    %562 = vmatprep.subr.mxu0 0.0
    %563 = vmatpush1.msra.mxu0 0.0
    %564 = vmatprep.subr.mxu0 0.0
    %565 = vmatpush1.msra.mxu0 0.0
    %566 = vmatprep.mubr.f32.mxu0 0.0
    %567 = vmatmul.mubr.f32.gmra.mrb[0].mxu0 %v500
    %v568 = vpop.f32.mrb[0].mxu0
    %v569 = vadd.f32 0.0, %v568
    %v570 = vpop.f32.mrb[0].mxu0
    %571 = vdwg.mxu0
    %v572 = vadd.f32 %v176, %v569
    %v573 = vtanh.pop %v572
    %v575 = vsel %vm198, %v573, 0
    %577 = vmatprep.subr.mxu0 0.0
    %578 = vmatpush1.msra.mxu0 %v194
    %579 = vmatprep.subr.mxu0 0.0
    %580 = vmatpush1.msra.mxu0 %v195
    %581 = vmatprep.subr.mxu0 0.0
    %582 = vmatpush1.msra.mxu0 %v196
    %583 = vmatprep.subr.mxu0 0.0
    %584 = vmatpush1.msra.mxu0 %v197
    %585 = vmatprep.subr.mxu0 0.0
    %586 = vmatpush1.msra.mxu0 0.0
    %587 = vmatprep.subr.mxu0 0.0
    %588 = vmatpush1.msra.mxu0 0.0
    %589 = vmatprep.subr.mxu0 0.0
    %590 = vmatpush1.msra.mxu0 0.0
    %591 = vmatprep.subr.mxu0 0.0
    %592 = vmatpush1.msra.mxu0 0.0
    %593 = vmatprep.subr.mxu0 0.0
    %594 = vmatpush1.msra.mxu0 0.0
    %595 = vmatprep.subr.mxu0 0.0
    %596 = vmatpush1.msra.mxu0 0.0
    %597 = vmatprep.subr.mxu0 0.0
    %598 = vmatpush1.msra.mxu0 0.0
    %599 = vmatprep.subr.mxu0 0.0
    %600 = vmatpush1.msra.mxu0 0.0
    %601 = vmatprep.subr.mxu0 0.0
    %602 = vmatpush1.msra.mxu0 0.0
    %603 = vmatprep.subr.mxu0 0.0
    %604 = vmatpush1.msra.mxu0 0.0
    %605 = vmatprep.subr.mxu0 0.0
    %606 = vmatpush1.msra.mxu0 0.0
    %607 = vmatprep.subr.mxu0 0.0
    %608 = vmatpush1.msra.mxu0 0.0
    %609 = vmatprep.subr.mxu0 0.0
    %610 = vmatpush1.msra.mxu0 0.0
    %611 = vmatprep.subr.mxu0 0.0
    %612 = vmatpush1.msra.mxu0 0.0
    %613 = vmatprep.subr.mxu0 0.0
    %614 = vmatpush1.msra.mxu0 0.0
    %615 = vmatprep.subr.mxu0 0.0
    %616 = vmatpush1.msra.mxu0 0.0
    %617 = vmatprep.subr.mxu0 0.0
    %618 = vmatpush1.msra.mxu0 0.0
    %619 = vmatprep.subr.mxu0 0.0
    %620 = vmatpush1.msra.mxu0 0.0
    %621 = vmatprep.subr.mxu0 0.0
    %622 = vmatpush1.msra.mxu0 0.0
    %623 = vmatprep.subr.mxu0 0.0
    %624 = vmatpush1.msra.mxu0 0.0
    %625 = vmatprep.subr.mxu0 0.0
    %626 = vmatpush1.msra.mxu0 0.0
    %627 = vmatprep.subr.mxu0 0.0
    %628 = vmatpush1.msra.mxu0 0.0
    %629 = vmatprep.subr.mxu0 0.0
    %630 = vmatpush1.msra.mxu0 0.0
    %631 = vmatprep.subr.mxu0 0.0
    %632 = vmatpush1.msra.mxu0 0.0
    %633 = vmatprep.subr.mxu0 0.0
    %634 = vmatpush1.msra.mxu0 0.0
    %635 = vmatprep.subr.mxu0 0.0
    %636 = vmatpush1.msra.mxu0 0.0
    %637 = vmatprep.subr.mxu0 0.0
    %638 = vmatpush1.msra.mxu0 0.0
    %639 = vmatprep.subr.mxu0 0.0
    %640 = vmatpush1.msra.mxu0 0.0
    %641 = vmatprep.mubr.f32.mxu0 0.0
    %642 = vmatmul.mubr.f32.gmra.mrb[0].mxu0 %v575
    %v643 = vpop.f32.mrb[0].mxu0
    %v644 = vadd.f32 0.0, %v643
    %v645 = vpop.f32.mrb[0].mxu0
    %646 = vdwg.mxu0
    %v647 = vadd.f32 %v181, %v644
    %v648 = vtanh.pop %v647
    %v650 = vsel %vm198, %v648, 0
    %652 = vmatprep.subr.mxu0 0.0
    %653 = vmatpush1.msra.mxu0 %v194
    %654 = vmatprep.subr.mxu0 0.0
    %655 = vmatpush1.msra.mxu0 %v195
    %656 = vmatprep.subr.mxu0 0.0
    %657 = vmatpush1.msra.mxu0 %v196
    %658 = vmatprep.subr.mxu0 0.0
    %659 = vmatpush1.msra.mxu0 %v197
    %660 = vmatprep.subr.mxu0 0.0
    %661 = vmatpush1.msra.mxu0 0.0
    %662 = vmatprep.subr.mxu0 0.0
    %663 = vmatpush1.msra.mxu0 0.0
    %664 = vmatprep.subr.mxu0 0.0
    %665 = vmatpush1.msra.mxu0 0.0
    %666 = vmatprep.subr.mxu0 0.0
    %667 = vmatpush1.msra.mxu0 0.0
    %668 = vmatprep.subr.mxu0 0.0
    %669 = vmatpush1.msra.mxu0 0.0
    %670 = vmatprep.subr.mxu0 0.0
    %671 = vmatpush1.msra.mxu0 0.0
    %672 = vmatprep.subr.mxu0 0.0
    %673 = vmatpush1.msra.mxu0 0.0
    %674 = vmatprep.subr.mxu0 0.0
    %675 = vmatpush1.msra.mxu0 0.0
    %676 = vmatprep.subr.mxu0 0.0
    %677 = vmatpush1.msra.mxu0 0.0
    %678 = vmatprep.subr.mxu0 0.0
    %679 = vmatpush1.msra.mxu0 0.0
    %680 = vmatprep.subr.mxu0 0.0
    %681 = vmatpush1.msra.mxu0 0.0
    %682 = vmatprep.subr.mxu0 0.0
    %683 = vmatpush1.msra.mxu0 0.0
    %684 = vmatprep.subr.mxu0 0.0
    %685 = vmatpush1.msra.mxu0 0.0
    %686 = vmatprep.subr.mxu0 0.0
    %687 = vmatpush1.msra.mxu0 0.0
    %688 = vmatprep.subr.mxu0 0.0
    %689 = vmatpush1.msra.mxu0 0.0
    %690 = vmatprep.subr.mxu0 0.0
    %691 = vmatpush1.msra.mxu0 0.0
    %692 = vmatprep.subr.mxu0 0.0
    %693 = vmatpush1.msra.mxu0 0.0
    %694 = vmatprep.subr.mxu0 0.0
    %695 = vmatpush1.msra.mxu0 0.0
    %696 = vmatprep.subr.mxu0 0.0
    %697 = vmatpush1.msra.mxu0 0.0
    %698 = vmatprep.subr.mxu0 0.0
    %699 = vmatpush1.msra.mxu0 0.0
    %700 = vmatprep.subr.mxu0 0.0
    %701 = vmatpush1.msra.mxu0 0.0
    %702 = vmatprep.subr.mxu0 0.0
    %703 = vmatpush1.msra.mxu0 0.0
    %704 = vmatprep.subr.mxu0 0.0
    %705 = vmatpush1.msra.mxu0 0.0
    %706 = vmatprep.subr.mxu0 0.0
    %707 = vmatpush1.msra.mxu0 0.0
    %708 = vmatprep.subr.mxu0 0.0
    %709 = vmatpush1.msra.mxu0 0.0
    %710 = vmatprep.subr.mxu0 0.0
    %711 = vmatpush1.msra.mxu0 0.0
    %712 = vmatprep.subr.mxu0 0.0
    %713 = vmatpush1.msra.mxu0 0.0
    %714 = vmatprep.subr.mxu0 0.0
    %715 = vmatpush1.msra.mxu0 0.0
    %716 = vmatprep.mubr.f32.mxu0 0.0
    %717 = vmatmul.mubr.f32.gmra.mrb[0].mxu0 %v650
    %v718 = vpop.f32.mrb[0].mxu0
    %v719 = vadd.f32 0.0, %v718
    %v720 = vpop.f32.mrb[0].mxu0
    %721 = vdwg.mxu0
    %v722 = vadd.f32 %v186, %v719
    %v723 = vtanh.pop %v722
    %v725 = vsel %vm198, %v723, 0
    %727 = vmatprep.subr.mxu0 0.0
    %728 = vmatpush1.msra.mxu0 %v194
    %729 = vmatprep.subr.mxu0 0.0
    %730 = vmatpush1.msra.mxu0 %v195
    %731 = vmatprep.subr.mxu0 0.0
    %732 = vmatpush1.msra.mxu0 %v196
    %733 = vmatprep.subr.mxu0 0.0
    %734 = vmatpush1.msra.mxu0 %v197
    %735 = vmatprep.subr.mxu0 0.0
    %736 = vmatpush1.msra.mxu0 0.0
    %737 = vmatprep.subr.mxu0 0.0
    %738 = vmatpush1.msra.mxu0 0.0
    %739 = vmatprep.subr.mxu0 0.0
    %740 = vmatpush1.msra.mxu0 0.0
    %741 = vmatprep.subr.mxu0 0.0
    %742 = vmatpush1.msra.mxu0 0.0
    %743 = vmatprep.subr.mxu0 0.0
    %744 = vmatpush1.msra.mxu0 0.0
    %745 = vmatprep.subr.mxu0 0.0
    %746 = vmatpush1.msra.mxu0 0.0
    %747 = vmatprep.subr.mxu0 0.0
    %748 = vmatpush1.msra.mxu0 0.0
    %749 = vmatprep.subr.mxu0 0.0
    %750 = vmatpush1.msra.mxu0 0.0
    %751 = vmatprep.subr.mxu0 0.0
    %752 = vmatpush1.msra.mxu0 0.0
    %753 = vmatprep.subr.mxu0 0.0
    %754 = vmatpush1.msra.mxu0 0.0
    %755 = vmatprep.subr.mxu0 0.0
    %756 = vmatpush1.msra.mxu0 0.0
    %757 = vmatprep.subr.mxu0 0.0
    %758 = vmatpush1.msra.mxu0 0.0
    %759 = vmatprep.subr.mxu0 0.0
    %760 = vmatpush1.msra.mxu0 0.0
    %761 = vmatprep.subr.mxu0 0.0
    %762 = vmatpush1.msra.mxu0 0.0
    %763 = vmatprep.subr.mxu0 0.0
    %764 = vmatpush1.msra.mxu0 0.0
    %765 = vmatprep.subr.mxu0 0.0
    %766 = vmatpush1.msra.mxu0 0.0
    %767 = vmatprep.subr.mxu0 0.0
    %768 = vmatpush1.msra.mxu0 0.0
    %769 = vmatprep.subr.mxu0 0.0
    %770 = vmatpush1.msra.mxu0 0.0
    %771 = vmatprep.subr.mxu0 0.0
    %772 = vmatpush1.msra.mxu0 0.0
    %773 = vmatprep.subr.mxu0 0.0
    %774 = vmatpush1.msra.mxu0 0.0
    %775 = vmatprep.subr.mxu0 0.0
    %776 = vmatpush1.msra.mxu0 0.0
    %777 = vmatprep.subr.mxu0 0.0
    %778 = vmatpush1.msra.mxu0 0.0
    %779 = vmatprep.subr.mxu0 0.0
    %780 = vmatpush1.msra.mxu0 0.0
    %781 = vmatprep.subr.mxu0 0.0
    %782 = vmatpush1.msra.mxu0 0.0
    %783 = vmatprep.subr.mxu0 0.0
    %784 = vmatpush1.msra.mxu0 0.0
    %785 = vmatprep.subr.mxu0 0.0
    %786 = vmatpush1.msra.mxu0 0.0
    %787 = vmatprep.subr.mxu0 0.0
    %788 = vmatpush1.msra.mxu0 0.0
    %789 = vmatprep.subr.mxu0 0.0
    %790 = vmatpush1.msra.mxu0 0.0
    %791 = vmatprep.mubr.f32.mxu0 0.0
    %792 = vmatmul.mubr.f32.gmra.mrb[0].mxu0 %v725
    %v793 = vpop.f32.mrb[0].mxu0
    %v794 = vadd.f32 0.0, %v793
    %v795 = vpop.f32.mrb[0].mxu0
    %796 = vdwg.mxu0
    %v797 = vadd.f32 %v191, %v794
    %v798 = vtanh.pop %v797
    %vm799 = vcmask 257024
    %800 = vst.msk [vmem:[#allocation2] sm:$0xf] %vm799, %v798
    // Predicated region
    $region14: #{tpu_custom_call.1} parent=1 // pred_check
      _
    $region15: #{tpu_custom_call.1} parent=1 // pred_check_branch
      %802 = sbr.rel (0) target = $region17
    $region16: #{tpu_custom_call.1} parent=1 // pred_region
      %s804 = ssub.s32 64, 64
      %805 = vsyncadd [#allocation3], %s804
      %s807 = sshll.u32 [#allocation2], 4
      %s808 = int_to_ptr.vmem [resolvable:$true] %s807
      %810 = dma.vmem_to_hbm [thread:$0]  %s808, 64, %s3, [#allocation3]
    $region17: #{tpu_custom_call.1} parent=1 // pred_fallthru
      _
    // Predicated region
    $region18: #{tpu_custom_call.1} parent=1 // pred_check
      _
    $region19: #{tpu_custom_call.1} parent=1 // pred_check_branch
      %812 = sbr.rel (0) target = $region21
    $region20: #{tpu_custom_call.1} parent=1 // pred_region
      %813 = dma.done [#allocation3], 64
    $region21: #{tpu_custom_call.1} parent=1 // pred_fallthru
      _
    %814 = vsyncpa [#allocation3], 1

</llo_original>
